<compile_context>
chip_gen: v7x
topology: tpu7x:2x2x1
jax: 0.10.0
libtpu: 0.0.40
codegen_flags: <defaults>
</compile_context>

<pallas_src>
import jax
import jax.numpy as jnp
from jax import lax
from jax.experimental import pallas as pl
from jax.experimental.pallas import tpu as pltpu


def kalman_scan_kernel(k_ref, imk_ref, z_ref, out_ref):
    """k_ref/imk_ref: (T, N, N) gain tables; z_ref/out_ref: (T, N, Bb)."""
    T, N, Bb = z_ref.shape

    def body(i, x):
        # x_i = (I - K_i) @ x_{i-1} + K_i @ z_i   (batch on lanes)
        x_new = (
            jnp.dot(imk_ref[i], x, preferred_element_type=jnp.float32)
            + jnp.dot(k_ref[i], z_ref[i], preferred_element_type=jnp.float32)
        )
        out_ref[i] = x_new        # dense, lane-wide store inside the loop
        return x_new

    lax.fori_loop(0, T, body, jnp.zeros((N, Bb), jnp.float32))


def _gain_sequence(q, r, N, T):
    """Data-independent Kalman gains K_i and (I - K_i), shapes (T, N, N)."""
    eye = jnp.eye(N, dtype=jnp.float32)
    Qd = q * eye                       # diag(Q)
    Rd = r * eye                       # diag(R)

    def step(P, _):
        P_prior = P + Qd
        S = P_prior + Rd
        K = P_prior @ jnp.linalg.inv(S)
        P_new = (eye - K) @ P_prior
        return P_new, (K, eye - K)

    _, (kmat, imk) = lax.scan(step, jnp.ones((N, N), jnp.float32), None,
                              length=T)
    return kmat, imk


def _pick_batch_block(B, T, N):
    """Lane-axis (batch) block size.

    * B <= 128: a single full-width block (block == full dim satisfies the
      (8,128) rule even when B is not a multiple of 128).
    * otherwise: a multiple of 128 sized so one (T, N, Bb) f32 block is a
      couple of MiB (double-buffered in+out stays under v5e's scoped VMEM and
      v7x's 64 MiB physical VMEM), capped so there are >= 2 grid steps for the
      v7x megacore and at 1024 lanes.
    """
    if B <= 128:
        return B
    target_block_bytes = 2 << 20
    bb = (target_block_bytes // (T * N * 4)) // 128 * 128
    half = (B // 2) // 128 * 128 or 128
    return int(max(128, min(bb, 1024, half)))


def kalman_forward(arr, q, r, *, batch_block=None):
    """Pallas forward for the KalmanFilter module.

    arr: (B, T, N) float; q, r: (N, 1) parameters (as in the PyTorch module).
    Returns (B, T, N) filtered states.
    """
    B, T, N = arr.shape
    arr = arr.astype(jnp.float32)
    q = jnp.reshape(q, (N, 1)).astype(jnp.float32)
    r = jnp.reshape(r, (N, 1)).astype(jnp.float32)

    # Gain tables depend only on the parameters -> compute once, outside.
    kmat, imk = _gain_sequence(q, r, N, T)          # (T, N, N) each

    Bb = int(batch_block) if batch_block is not None else _pick_batch_block(B, T, N)
    n_blocks = pl.cdiv(B, Bb)
    Bp = n_blocks * Bb

    # (B, T, N) -> (T, N, B): batch on lanes for lane-dense blocks & stores.
    arr_t = jnp.transpose(arr, (1, 2, 0))
    if Bp != B:
        arr_t = jnp.pad(arr_t, ((0, 0), (0, 0), (0, Bp - B)))

    out_t = pl.pallas_call(
        kalman_scan_kernel,
        out_shape=jax.ShapeDtypeStruct((T, N, Bp), jnp.float32),
        grid_spec=pltpu.PrefetchScalarGridSpec(
            num_scalar_prefetch=0,
            grid=(n_blocks,),
            in_specs=[
                pl.BlockSpec((T, N, N), lambda g: (0, 0, 0)),    # K_i
                pl.BlockSpec((T, N, N), lambda g: (0, 0, 0)),    # I - K_i
                pl.BlockSpec((T, N, Bb), lambda g: (0, 0, g)),   # observations
            ],
            out_specs=pl.BlockSpec((T, N, Bb), lambda g: (0, 0, g)),
        ),
        compiler_params=pltpu.CompilerParams(
            dimension_semantics=("parallel",),
            vmem_limit_bytes=32 * 1024 * 1024,
        ),
    )(kmat, imk, arr_t)

    out = jnp.transpose(out_t, (2, 0, 1))           # (Bp, T, N)
    return out[:B] if Bp != B else out


def kalman_reference(arr, q, r):
    """Pure-JAX restatement of the PyTorch forward (for verification)."""
    B, T, N = arr.shape
    eye = jnp.eye(N, dtype=arr.dtype)
    Qd = jnp.reshape(q, (N, 1)) * eye
    Rd = jnp.reshape(r, (N, 1)) * eye
    arr_t = jnp.transpose(arr, (0, 2, 1))            # (B, N, T)
    x = jnp.zeros((B, N, 1), arr.dtype)
    P = jnp.ones((B, N, N), arr.dtype)
    outs = []
    for i in range(T):
        z = arr_t[:, :, i:i + 1]
        P_prior = P + Qd
        S = P_prior + Rd
        K = P_prior @ jnp.linalg.inv(S)
        x = x + K @ (z - x)
        P = (eye - K) @ P_prior
        outs.append(x)
    res = jnp.concatenate(outs, axis=-1)             # (B, N, T)
    return jnp.transpose(res, (0, 2, 1))             # (B, T, N)


if __name__ == "__main__":
    B, T, N = 128, 8, 8   # batch (lanes), sequence length, n_feature
    key = jax.random.PRNGKey(0)
    k_arr, k_q, k_r = jax.random.split(key, 3)
    arr = jax.random.normal(k_arr, (B, T, N), dtype=jnp.float32)
    Q = jax.random.normal(k_q, (N, 1), dtype=jnp.float32)   # Parameter Q ~ randn(N,1)
    R = jax.random.normal(k_r, (N, 1), dtype=jnp.float32)   # Parameter R ~ randn(N,1)

    out = jax.block_until_ready(kalman_forward(arr, Q, R))

    ref = kalman_reference(arr, Q, R)
    assert out.shape == (B, T, N)
    max_err = float(jnp.max(jnp.abs(out - ref)))
    assert jnp.allclose(out, ref, rtol=1e-2, atol=1e-2), (
        "mismatch: max abs diff = %f" % max_err)
    print("KERNEL_OK")
</pallas_src>

<mosaic_0001>
module attributes {stable_mosaic.version = 11 : i64} {
  func.func @kalman_scan_kernel(%arg0: i32, %arg1: memref<8x8x8xf32, #tpu.memory_space<vmem>>, %arg2: memref<8x8x8xf32, #tpu.memory_space<vmem>>, %arg3: memref<8x8x128xf32, #tpu.memory_space<vmem>>, %arg4: memref<8x8x128xf32, #tpu.memory_space<vmem>>) attributes {dimension_semantics = [#tpu.dimension_semantics<parallel>], iteration_bounds = array<i64: 1>, scalar_prefetch = 0 : i64, scratch_operands = 0 : i64, tpu.core_type = #tpu.core_type<tc>, window_params = [{pipeline_mode = #tpu.pipeline_mode<synchronous>, transform_indices = @transform_0, window_bounds = array<i64: 8, 8, 8>}, {pipeline_mode = #tpu.pipeline_mode<synchronous>, transform_indices = @transform_1, window_bounds = array<i64: 8, 8, 8>}, {transform_indices = @transform_2, window_bounds = array<i64: 8, 8, 128>}, {transform_indices = @transform_3, window_bounds = array<i64: 8, 8, 128>}]} {
    %cst = arith.constant 0.000000e+00 : f32
    %0 = vector.broadcast %cst : f32 to vector<8x128xf32>
    %c0_i32 = arith.constant 0 : i32
    %c8_i32 = arith.constant 8 : i32
    %1 = arith.addi %c0_i32, %c8_i32 : i32
    %c1_i32 = arith.constant 1 : i32
    %2 = scf.for %arg5 = %c0_i32 to %1 step %c1_i32 iter_args(%arg6 = %0) -> (vector<8x128xf32>)  : i32 {
      %3 = arith.index_cast %arg5 : i32 to index
      %c0 = arith.constant 0 : index
      %c0_1 = arith.constant 0 : index
      %4 = vector.load %arg2[%3, %c0, %c0_1] : memref<8x8x8xf32, #tpu.memory_space<vmem>>, vector<1x8x8xf32>
      %5 = vector.shape_cast %4 : vector<1x8x8xf32> to vector<8x8xf32>
      %cst_2 = arith.constant dense<0.000000e+00> : vector<8x128xf32>
      %6 = tpu.matmul %5, %arg6, %cst_2 {dimension_numbers = #tpu.dot_dimension_numbers<[1], [0], [0], [1], [0, 0, 1, 1], [], []>} : vector<8x8xf32>, vector<8x128xf32>, vector<8x128xf32> -> vector<8x128xf32>
      %7 = arith.index_cast %arg5 : i32 to index
      %c0_3 = arith.constant 0 : index
      %c0_4 = arith.constant 0 : index
      %8 = vector.load %arg1[%7, %c0_3, %c0_4] : memref<8x8x8xf32, #tpu.memory_space<vmem>>, vector<1x8x8xf32>
      %9 = vector.shape_cast %8 : vector<1x8x8xf32> to vector<8x8xf32>
      %10 = arith.index_cast %arg5 : i32 to index
      %c0_5 = arith.constant 0 : index
      %c0_6 = arith.constant 0 : index
      %11 = vector.load %arg3[%10, %c0_5, %c0_6] : memref<8x8x128xf32, #tpu.memory_space<vmem>>, vector<1x8x128xf32>
      %12 = vector.shape_cast %11 : vector<1x8x128xf32> to vector<8x128xf32>
      %cst_7 = arith.constant dense<0.000000e+00> : vector<8x128xf32>
      %13 = tpu.matmul %9, %12, %cst_7 {dimension_numbers = #tpu.dot_dimension_numbers<[1], [0], [0], [1], [0, 0, 1, 1], [], []>} : vector<8x8xf32>, vector<8x128xf32>, vector<8x128xf32> -> vector<8x128xf32>
      %14 = arith.addf %6, %13 : vector<8x128xf32>
      %15 = arith.index_cast %arg5 : i32 to index
      %c0_8 = arith.constant 0 : index
      %c0_9 = arith.constant 0 : index
      %16 = vector.load %arg4[%15, %c0_8, %c0_9] : memref<8x8x128xf32, #tpu.memory_space<vmem>>, vector<1x8x128xf32>
      %17 = vector.shape_cast %16 : vector<1x8x128xf32> to vector<8x128xf32>
      %18 = vector.shape_cast %14 : vector<8x128xf32> to vector<1x8x128xf32>
      tpu.vector_store %arg4[%15, %c0_8, %c0_9], %18 {strides = array<i32>} : memref<8x8x128xf32, #tpu.memory_space<vmem>>, vector<1x8x128xf32>,
      scf.yield %14 : vector<8x128xf32>
    }
    %c8_i32_0 = arith.constant 8 : i32
    return
  }
  func.func @transform_0(%arg0: i32) -> (i32, i32, i32) {
    %c0_i32 = arith.constant 0 : i32
    %c0_i32_0 = arith.constant 0 : i32
    %c0_i32_1 = arith.constant 0 : i32
    %c0_i32_2 = arith.constant 0 : i32
    return %c0_i32, %c0_i32_0, %c0_i32_1 : i32, i32, i32
  }
  func.func @transform_1(%arg0: i32) -> (i32, i32, i32) {
    %c0_i32 = arith.constant 0 : i32
    %c0_i32_0 = arith.constant 0 : i32
    %c0_i32_1 = arith.constant 0 : i32
    %c0_i32_2 = arith.constant 0 : i32
    return %c0_i32, %c0_i32_0, %c0_i32_1 : i32, i32, i32
  }
  func.func @transform_2(%arg0: i32) -> (i32, i32, i32) {
    %c0_i32 = arith.constant 0 : i32
    %c0_i32_0 = arith.constant 0 : i32
    %c0_i32_1 = arith.constant 0 : i32
    return %c0_i32, %c0_i32_0, %arg0 : i32, i32, i32
  }
  func.func @transform_3(%arg0: i32) -> (i32, i32, i32) {
    %c0_i32 = arith.constant 0 : i32
    %c0_i32_0 = arith.constant 0 : i32
    %c0_i32_1 = arith.constant 0 : i32
    return %c0_i32, %c0_i32_0, %arg0 : i32, i32, i32
  }
}

</mosaic_0001>

<llo_original>
// kernel: tpu_custom_call.1
$region0: #{tpu_custom_call.1}
  #allocation0 [shape = 'u32[]', space=smem, size = 0x4, offset = 0x4, fixed_abs, tag = 'smem constant byte address 0x4 - core index']
  #allocation1 [shape = 'u32[144,128]{1,0:T(1,128)}', space=vmem, size = 0x12000, scoped, tag = 'internal scratch']
  %s0 = inlined_call_operand.hbm [shape: f32[8,8,8], index: 0, kind: input, shape index: {}]
  %s1 = inlined_call_operand.hbm [shape: f32[8,8,8], index: 1, kind: input, shape index: {}]
  %s2 = inlined_call_operand.hbm [shape: f32[8,8,128], index: 2, kind: input, shape index: {}]
  %s3 = inlined_call_operand.hbm [shape: f32[8,8,128], index: 3, kind: output, shape index: {}]
  %s4 = sld [smem:[#allocation0]]
  $region41: #{tpu_custom_call.1} parent=0
    _
  %s6 = ssub.s32 1, %s4
  %s7 = scalar_select 0, %s6, %s4
  $region1: #{tpu_custom_call.1} parent=0
    #allocation2 [shape = 'u8[32768]{0}', space=vmem, size = 0x8000, scoped, tag = 'input window, operand 0, single buffered']
    #allocation3 [shape = 's32[1]{0}', space=sflag, size = 0x4, scoped, tag = 'scoped memory for tpu_custom_call.1']
    #allocation4 [shape = 's32[1]{0}', space=sflag, size = 0x4, scoped, tag = 'scoped memory for tpu_custom_call.1']
    #allocation5 [shape = 'u8[32768]{0}', space=vmem, size = 0x8000, scoped, tag = 'input window, operand 1, single buffered']
    #allocation6 [shape = 's32[1]{0}', space=sflag, size = 0x4, scoped, tag = 'scoped memory for tpu_custom_call.1']
    #allocation7 [shape = 'u8[32768]{0}', space=vmem, size = 0x8000, scoped, tag = 'input window, operand 2, single buffered']
    #allocation8 [shape = 'u8[32768]{0}', space=vmem, size = 0x8000, scoped, tag = 'output window, operand 0, single buffered']
    %8 = vsyncpa [#allocation3], 0
    %9 = vsyncpa [#allocation6], 0
    %10 = vsyncpa [#allocation4], 0
    // Predicated region
    $region2: #{tpu_custom_call.1} parent=1 // pred_check
      _
    $region3: #{tpu_custom_call.1} parent=1 // pred_check_branch
      %12 = sbr.rel (0) target = $region5
    $region4: #{tpu_custom_call.1} parent=1 // pred_region
      %s14 = ssub.s32 1024, 1024
      %15 = vsyncadd [#allocation3], %s14
      %s16 = sshll.u32 [#allocation2], 4
      %s17 = int_to_ptr.vmem [resolvable:$true] %s16
      %22 = dma.hbm_to_vmem [thread:$0]  %s0, 1024, %s17, [#allocation3], 128, 128, 8
    $region5: #{tpu_custom_call.1} parent=1 // pred_fallthru
      _
    // Predicated region
    $region6: #{tpu_custom_call.1} parent=1 // pred_check
      _
    $region7: #{tpu_custom_call.1} parent=1 // pred_check_branch
      %24 = sbr.rel (0) target = $region9
    $region8: #{tpu_custom_call.1} parent=1 // pred_region
      %s26 = ssub.s32 1024, 1024
      %27 = vsyncadd [#allocation6], %s26
      %s28 = sshll.u32 [#allocation5], 4
      %s29 = int_to_ptr.vmem [resolvable:$true] %s28
      %34 = dma.hbm_to_vmem [thread:$0]  %s1, 1024, %s29, [#allocation6], 128, 128, 8
    $region9: #{tpu_custom_call.1} parent=1 // pred_fallthru
      _
    // Predicated region
    $region10: #{tpu_custom_call.1} parent=1 // pred_check
      _
    $region11: #{tpu_custom_call.1} parent=1 // pred_check_branch
      %36 = sbr.rel (0) target = $region13
    $region12: #{tpu_custom_call.1} parent=1 // pred_region
      %s38 = ssub.s32 1024, 1024
      %39 = vsyncadd [#allocation6], %s38
      %s40 = sshll.u32 [#allocation7], 4
      %s41 = int_to_ptr.vmem [resolvable:$true] %s40
      %46 = dma.hbm_to_vmem [thread:$0]  %s2, 1024, %s41, [#allocation6], 128, 128, 8
    $region13: #{tpu_custom_call.1} parent=1 // pred_fallthru
      _
    // Predicated region
    $region14: #{tpu_custom_call.1} parent=1 // pred_check
      _
    $region15: #{tpu_custom_call.1} parent=1 // pred_check_branch
      %48 = sbr.rel (0) target = $region17
    $region16: #{tpu_custom_call.1} parent=1 // pred_region
      %49 = dma.done [#allocation3], 1024
    $region17: #{tpu_custom_call.1} parent=1 // pred_fallthru
      _
    // Predicated region
    $region18: #{tpu_custom_call.1} parent=1 // pred_check
      _
    $region19: #{tpu_custom_call.1} parent=1 // pred_check_branch
      %51 = sbr.rel (0) target = $region21
    $region20: #{tpu_custom_call.1} parent=1 // pred_region
      %52 = dma.done [#allocation6], 1024
    $region21: #{tpu_custom_call.1} parent=1 // pred_fallthru
      _
    // Predicated region
    $region22: #{tpu_custom_call.1} parent=1 // pred_check
      _
    $region23: #{tpu_custom_call.1} parent=1 // pred_check_branch
      %54 = sbr.rel (0) target = $region25
    $region24: #{tpu_custom_call.1} parent=1 // pred_region
      %55 = dma.done [#allocation6], 1024
    $region25: #{tpu_custom_call.1} parent=1 // pred_fallthru
      _
    loop: start=0, step=1, limit=8
    $region26: #{tpu_custom_call.1} parent=1 // loop_pre_header
      _
    $region27: #{tpu_custom_call.1} parent=1 // loop_header
      %s57 = sphi 0, %s61
      %p58 = scmp.ge.s32.totalorder %s57, 8
      %v62 = vphi 0.0, %v214
    $region28: #{tpu_custom_call.1} parent=1 // loop_header_branch
      %60 = sbr.rel (%p58) target = $region32
    $region29: #{tpu_custom_call.1} parent=1 // loop_body
      %s63 = smul.u32 %s57, 8
      %s64 = scalar_lea.vmem [#allocation5], %s63
      %v65 = vld [vmem:[%s64] sm:$0xff]
      %s66 = scalar_lea.vmem [#allocation2], %s63
      %v67 = vld [vmem:[%s66] sm:$0xff]
      %s68 = scalar_lea.vmem [#allocation7], %s63
      %v69 = vld [vmem:[%s68] sm:$0xff]
      %vm70 = vcmask 64512
      %v72 = vsel %vm70, %v67, 0
      %74 = vmatprep.subr.mxu0 0.0
      %75 = vmatpush1.msra.mxu0 %v69
      %76 = vmatprep.subr.mxu0 0.0
      %77 = vmatpush1.msra.mxu0 0.0
      %78 = vmatprep.subr.mxu0 0.0
      %79 = vmatpush1.msra.mxu0 0.0
      %80 = vmatprep.subr.mxu0 0.0
      %81 = vmatpush1.msra.mxu0 0.0
      %82 = vmatprep.subr.mxu0 0.0
      %83 = vmatpush1.msra.mxu0 0.0
      %84 = vmatprep.subr.mxu0 0.0
      %85 = vmatpush1.msra.mxu0 0.0
      %86 = vmatprep.subr.mxu0 0.0
      %87 = vmatpush1.msra.mxu0 0.0
      %88 = vmatprep.subr.mxu0 0.0
      %89 = vmatpush1.msra.mxu0 0.0
      %90 = vmatprep.subr.mxu0 0.0
      %91 = vmatpush1.msra.mxu0 0.0
      %92 = vmatprep.subr.mxu0 0.0
      %93 = vmatpush1.msra.mxu0 0.0
      %94 = vmatprep.subr.mxu0 0.0
      %95 = vmatpush1.msra.mxu0 0.0
      %96 = vmatprep.subr.mxu0 0.0
      %97 = vmatpush1.msra.mxu0 0.0
      %98 = vmatprep.subr.mxu0 0.0
      %99 = vmatpush1.msra.mxu0 0.0
      %100 = vmatprep.subr.mxu0 0.0
      %101 = vmatpush1.msra.mxu0 0.0
      %102 = vmatprep.subr.mxu0 0.0
      %103 = vmatpush1.msra.mxu0 0.0
      %104 = vmatprep.subr.mxu0 0.0
      %105 = vmatpush1.msra.mxu0 0.0
      %106 = vmatprep.subr.mxu0 0.0
      %107 = vmatpush1.msra.mxu0 0.0
      %108 = vmatprep.subr.mxu0 0.0
      %109 = vmatpush1.msra.mxu0 0.0
      %110 = vmatprep.subr.mxu0 0.0
      %111 = vmatpush1.msra.mxu0 0.0
      %112 = vmatprep.subr.mxu0 0.0
      %113 = vmatpush1.msra.mxu0 0.0
      %114 = vmatprep.subr.mxu0 0.0
      %115 = vmatpush1.msra.mxu0 0.0
      %116 = vmatprep.subr.mxu0 0.0
      %117 = vmatpush1.msra.mxu0 0.0
      %118 = vmatprep.subr.mxu0 0.0
      %119 = vmatpush1.msra.mxu0 0.0
      %120 = vmatprep.subr.mxu0 0.0
      %121 = vmatpush1.msra.mxu0 0.0
      %122 = vmatprep.subr.mxu0 0.0
      %123 = vmatpush1.msra.mxu0 0.0
      %124 = vmatprep.subr.mxu0 0.0
      %125 = vmatpush1.msra.mxu0 0.0
      %126 = vmatprep.subr.mxu0 0.0
      %127 = vmatpush1.msra.mxu0 0.0
      %128 = vmatprep.subr.mxu0 0.0
      %129 = vmatpush1.msra.mxu0 0.0
      %130 = vmatprep.subr.mxu0 0.0
      %131 = vmatpush1.msra.mxu0 0.0
      %132 = vmatprep.subr.mxu0 0.0
      %133 = vmatpush1.msra.mxu0 0.0
      %134 = vmatprep.subr.mxu0 0.0
      %135 = vmatpush1.msra.mxu0 0.0
      %136 = vmatprep.subr.mxu0 0.0
      %137 = vmatpush1.msra.mxu0 0.0
      %138 = vmatprep.mubr.f32.mxu0 0.0
      %139 = vmatmul.mubr.f32.gmra.mrb[0].mxu0 %v72
      %v140 = vpop.f32.mrb[0].mxu0
      %v141 = vadd.f32 0.0, %v140
      %v142 = vpop.f32.mrb[0].mxu0
      %143 = vdwg.mxu0
      %v145 = vsel %vm70, %v65, 0
      %147 = vmatprep.subr.mxu0 0.0
      %148 = vmatpush1.msra.mxu0 %v62
      %149 = vmatprep.subr.mxu0 0.0
      %150 = vmatpush1.msra.mxu0 0.0
      %151 = vmatprep.subr.mxu0 0.0
      %152 = vmatpush1.msra.mxu0 0.0
      %153 = vmatprep.subr.mxu0 0.0
      %154 = vmatpush1.msra.mxu0 0.0
      %155 = vmatprep.subr.mxu0 0.0
      %156 = vmatpush1.msra.mxu0 0.0
      %157 = vmatprep.subr.mxu0 0.0
      %158 = vmatpush1.msra.mxu0 0.0
      %159 = vmatprep.subr.mxu0 0.0
      %160 = vmatpush1.msra.mxu0 0.0
      %161 = vmatprep.subr.mxu0 0.0
      %162 = vmatpush1.msra.mxu0 0.0
      %163 = vmatprep.subr.mxu0 0.0
      %164 = vmatpush1.msra.mxu0 0.0
      %165 = vmatprep.subr.mxu0 0.0
      %166 = vmatpush1.msra.mxu0 0.0
      %167 = vmatprep.subr.mxu0 0.0
      %168 = vmatpush1.msra.mxu0 0.0
      %169 = vmatprep.subr.mxu0 0.0
      %170 = vmatpush1.msra.mxu0 0.0
      %171 = vmatprep.subr.mxu0 0.0
      %172 = vmatpush1.msra.mxu0 0.0
      %173 = vmatprep.subr.mxu0 0.0
      %174 = vmatpush1.msra.mxu0 0.0
      %175 = vmatprep.subr.mxu0 0.0
      %176 = vmatpush1.msra.mxu0 0.0
      %177 = vmatprep.subr.mxu0 0.0
      %178 = vmatpush1.msra.mxu0 0.0
      %179 = vmatprep.subr.mxu0 0.0
      %180 = vmatpush1.msra.mxu0 0.0
      %181 = vmatprep.subr.mxu0 0.0
      %182 = vmatpush1.msra.mxu0 0.0
      %183 = vmatprep.subr.mxu0 0.0
      %184 = vmatpush1.msra.mxu0 0.0
      %185 = vmatprep.subr.mxu0 0.0
      %186 = vmatpush1.msra.mxu0 0.0
      %187 = vmatprep.subr.mxu0 0.0
      %188 = vmatpush1.msra.mxu0 0.0
      %189 = vmatprep.subr.mxu0 0.0
      %190 = vmatpush1.msra.mxu0 0.0
      %191 = vmatprep.subr.mxu0 0.0
      %192 = vmatpush1.msra.mxu0 0.0
      %193 = vmatprep.subr.mxu0 0.0
      %194 = vmatpush1.msra.mxu0 0.0
      %195 = vmatprep.subr.mxu0 0.0
      %196 = vmatpush1.msra.mxu0 0.0
      %197 = vmatprep.subr.mxu0 0.0
      %198 = vmatpush1.msra.mxu0 0.0
      %199 = vmatprep.subr.mxu0 0.0
      %200 = vmatpush1.msra.mxu0 0.0
      %201 = vmatprep.subr.mxu0 0.0
      %202 = vmatpush1.msra.mxu0 0.0
      %203 = vmatprep.subr.mxu0 0.0
      %204 = vmatpush1.msra.mxu0 0.0
      %205 = vmatprep.subr.mxu0 0.0
      %206 = vmatpush1.msra.mxu0 0.0
      %207 = vmatprep.subr.mxu0 0.0
      %208 = vmatpush1.msra.mxu0 0.0
      %209 = vmatprep.subr.mxu0 0.0
      %210 = vmatpush1.msra.mxu0 0.0
      %211 = vmatprep.mubr.f32.mxu0 0.0
      %212 = vmatmul.mubr.f32.gmra.mrb[0].mxu0 %v145
      %v213 = vpop.f32.mrb[0].mxu0
      %v214 = vadd.f32 %v141, %v213
      %v215 = vpop.f32.mrb[0].mxu0
      %216 = vdwg.mxu0
      %s217 = scalar_lea.vmem [#allocation8], %s63
      %218 = vst [vmem:[%s217] sm:$0xff] %v214
    $region30: #{tpu_custom_call.1} parent=1 // loop_footer
      %s61 = sadd.s32 1, %s57
    $region31: #{tpu_custom_call.1} parent=1 // loop_footer_branch
      %56 = sbr.rel target = $region27
    $region32: #{tpu_custom_call.1} parent=1 // loop_exit
      _
    // Predicated region
    $region33: #{tpu_custom_call.1} parent=1 // pred_check
      _
    $region34: #{tpu_custom_call.1} parent=1 // pred_check_branch
      %220 = sbr.rel (0) target = $region36
    $region35: #{tpu_custom_call.1} parent=1 // pred_region
      %s222 = ssub.s32 1024, 1024
      %223 = vsyncadd [#allocation4], %s222
      %s224 = sshll.u32 [#allocation8], 4
      %s225 = int_to_ptr.vmem [resolvable:$true] %s224
      %230 = dma.vmem_to_hbm [thread:$0]  %s225, 1024, %s3, [#allocation4], 128, 128, 8
    $region36: #{tpu_custom_call.1} parent=1 // pred_fallthru
      _
    // Predicated region
    $region37: #{tpu_custom_call.1} parent=1 // pred_check
      _
    $region38: #{tpu_custom_call.1} parent=1 // pred_check_branch
      %232 = sbr.rel (0) target = $region40
    $region39: #{tpu_custom_call.1} parent=1 // pred_region
      %233 = dma.done [#allocation4], 1024
    $region40: #{tpu_custom_call.1} parent=1 // pred_fallthru
      _
    %234 = vsyncpa [#allocation3], 1
    %235 = vsyncpa [#allocation6], 1
    %236 = vsyncpa [#allocation4], 1

</llo_original>
